<compile_context>
chip_gen: v5e
topology: v5e:2x2
jax: 0.10.0
libtpu: 0.0.40
codegen_flags: <defaults>
</compile_context>

<pallas_src>
import jax
import jax.numpy as jnp
from jax import lax
from jax.experimental import pallas as pl
from jax.experimental.pallas import tpu as pltpu


def _round_up(x: int, m: int) -> int:
    return (x + m - 1) // m * m


def mean_critic_kernel(state_ref, action_ref, mean_ref,
                       w1_ref, w4_ref, w0_ref, b_in_ref,
                       w2_ref, b2_ref, w3t_ref, b3_ref,
                       out_ref):
    f32 = jnp.float32
    cdt = w1_ref.dtype  # MXU operand dtype (bfloat16)

    # Layer 1: three column-embedded matmuls (each weight only populates its own
    # slice of the 128-wide hidden vector, rest zero) summed in f32 -> identical
    # to concat(state_dense, action_dense, mean_action_dense) pre-activation.
    pre = (
        jnp.dot(state_ref[...].astype(cdt), w1_ref[...], preferred_element_type=f32)
        + jnp.dot(action_ref[...].astype(cdt), w4_ref[...], preferred_element_type=f32)
        + jnp.dot(mean_ref[...].astype(cdt), w0_ref[...], preferred_element_type=f32)
        + b_in_ref[...]
    )
    hidden = jnp.maximum(pre, 0.0)                       # (TB, 128) f32

    # fc2 + ReLU  (K = 2*mid_dim + 64 = 128)
    h = jnp.maximum(
        jnp.dot(hidden.astype(cdt), w2_ref[...], preferred_element_type=f32)
        + b2_ref[...],
        0.0,
    )                                                    # (TB, mid_dim) f32

    # fc3 computed transposed so the stored output is lane-dense:
    # out[o, b] = sum_k w3t[o, k] * h[b, k] + b3[o]   -> (output_size, TB)
    out = lax.dot_general(
        w3t_ref[...], h.astype(cdt),
        dimension_numbers=(((1,), (1,)), ((), ())),
        preferred_element_type=f32,
    ) + b3_ref[...]
    out_ref[...] = out.astype(out_ref.dtype)


def init_params(key, state_dim, action_dim, action_len, mid_dim, output_size,
                compute_dtype=jnp.bfloat16):
    """PyTorch-style nn.Linear init; weights stored transposed (in, out)."""
    def linear(k, fan_in, fan_out):
        kw, kb = jax.random.split(k)
        bound = 1.0 / float(fan_in) ** 0.5
        w = jax.random.uniform(kw, (fan_in, fan_out), jnp.float32, -bound, bound)
        b = jax.random.uniform(kb, (fan_out,), jnp.float32, -bound, bound)
        return w, b

    k0, k1, k4, k2, k3 = jax.random.split(key, 5)
    w0, b0 = linear(k0, action_dim, 64)          # fc0: mean_action -> 64
    w1, b1 = linear(k1, state_dim, mid_dim)      # fc1: state       -> mid_dim
    w4, b4 = linear(k4, action_len, mid_dim)     # fc4: action      -> mid_dim
    d_hidden = 2 * mid_dim + 64
    w2, b2 = linear(k2, d_hidden, mid_dim)       # fc2
    w3, b3 = linear(k3, mid_dim, output_size)    # fc3

    # Column-embedded layer-1 weights (zeros outside each layer's column slice).
    w1p = jnp.zeros((state_dim, d_hidden), jnp.float32).at[:, :mid_dim].set(w1)
    w4p = jnp.zeros((action_len, d_hidden), jnp.float32).at[:, mid_dim:2 * mid_dim].set(w4)
    w0p = jnp.zeros((action_dim, d_hidden), jnp.float32).at[:, 2 * mid_dim:].set(w0)
    b_in = jnp.concatenate([b1, b4, b0])[None, :]        # (1, d_hidden) f32

    return dict(
        w1p=w1p.astype(compute_dtype), w4p=w4p.astype(compute_dtype),
        w0p=w0p.astype(compute_dtype), b_in=b_in,
        w2=w2.astype(compute_dtype), b2=b2[None, :],
        w3t=w3.T.astype(compute_dtype), b3=b3[:, None],
        output_size=output_size, compute_dtype=compute_dtype,
        raw=dict(w0=w0, b0=b0, w1=w1, b1=b1, w4=w4, b4=b4,
                 w2=w2, b2=b2, w3=w3, b3=b3),
    )


def mean_critic_forward(params, state, action, mean_action, *, max_batch_tile=2048):
    """Fused forward (id=None path)."""
    B = state.shape[0]
    output_size = params["output_size"]
    w1p, w4p, w0p, b_in = params["w1p"], params["w4p"], params["w0p"], params["b_in"]
    w2, b2 = params["w2"], params["b2"]
    w3t, b3 = params["w3t"], params["b3"]
    state_dim, d_hidden = w1p.shape
    action_len = w4p.shape[0]
    action_dim = w0p.shape[0]
    mid_dim = w2.shape[1]
    d_in = state_dim + action_len + action_dim

    assert state.shape == (B, state_dim)
    assert action.shape == (B, action_len)
    assert mean_action.shape == (B, action_dim)

    # Batch tile: multiple of 128 (lane-dense transposed output). Target >=4
    # grid steps when the batch allows it (v7x dual-TC occupancy); cap tile size
    # to amortize per-step overhead without blowing VMEM.
    max_batch_tile = max(128, _round_up(max_batch_tile, 128))
    Bp0 = _round_up(B, 128)
    TB = min(max_batch_tile, max(128, _round_up(Bp0 // 4, 128)))
    Bp = _round_up(B, TB)
    grid = (Bp // TB,)

    def pad(a):
        a = a.astype(jnp.float32)
        return jnp.pad(a, ((0, Bp - B), (0, 0))) if Bp != B else a

    state_p, action_p, mean_p = pad(state), pad(action), pad(mean_action)

    weight_bytes = (w1p.size + w4p.size + w0p.size + w2.size + w3t.size) * 2 \
        + (b_in.size + b2.size + b3.size) * 4
    cost = pl.CostEstimate(
        flops=2 * Bp * (d_in * d_hidden + d_hidden * mid_dim + mid_dim * output_size),
        transcendentals=0,
        bytes_accessed=int(Bp * d_in * 4 + Bp * output_size * 4 + weight_bytes),
    )

    batch_spec = lambda d: pl.BlockSpec((TB, d), lambda i: (i, 0))   # streamed
    const = lambda shape: pl.BlockSpec(shape, lambda i: (0, 0))      # VMEM-resident

    out_t = pl.pallas_call(
        mean_critic_kernel,
        out_shape=jax.ShapeDtypeStruct((output_size, Bp), jnp.float32),
        grid=grid,
        in_specs=[
            batch_spec(state_dim),
            batch_spec(action_len),
            batch_spec(action_dim),
            const(w1p.shape), const(w4p.shape), const(w0p.shape), const(b_in.shape),
            const(w2.shape), const(b2.shape),
            const(w3t.shape), const(b3.shape),
        ],
        out_specs=pl.BlockSpec((output_size, TB), lambda i: (0, i)),
        compiler_params=pltpu.CompilerParams(
            dimension_semantics=("parallel",),      # batch tiles are independent
            vmem_limit_bytes=24 * 1024 * 1024,      # conservative (v7x has 64 MiB/TC)
        ),
        cost_estimate=cost,
    )(state_p, action_p, mean_p, w1p, w4p, w0p, b_in, w2, b2, w3t, b3)

    return out_t[:, :B].T   # (B, output_size)


def reference_forward(params, state, action, mean_action):
    """Pure-JAX reference of the PyTorch forward (id=None path), using the same
    bf16-operand / f32-accumulation numerics as the kernel."""
    r = params["raw"]
    cdt = params["compute_dtype"]
    relu = lambda v: jnp.maximum(v, 0.0)
    dot = lambda a, w: jnp.dot(a.astype(cdt), w.astype(cdt),
                               preferred_element_type=jnp.float32)
    mean_action_dense = relu(dot(mean_action, r["w0"]) + r["b0"])
    action_dense = relu(dot(action, r["w4"]) + r["b4"])
    state_dense = relu(dot(state, r["w1"]) + r["b1"])
    state_action = jnp.concatenate(
        [state_dense, action_dense, mean_action_dense], axis=1)
    out = relu(dot(state_action, r["w2"]) + r["b2"])
    return dot(out, r["w3"]) + r["b3"]


if __name__ == "__main__":
    state_dim, action_dim, action_len, mid_dim, output_size = 16, 8, 10, 32, 1

    key = jax.random.PRNGKey(0)
    kp, ks, ka, km = jax.random.split(key, 4)
    params = init_params(kp, state_dim, action_dim, action_len, mid_dim, output_size)

    # Small demo batch (single grid step, batch padded to 128).
    B = 8
    state = jax.random.normal(ks, (B, state_dim), jnp.float32)
    action = jax.random.normal(ka, (B, action_len), jnp.float32)
    mean_action = jax.random.normal(km, (B, action_dim), jnp.float32)

    out = jax.block_until_ready(mean_critic_forward(params, state, action, mean_action))
    ref = reference_forward(params, state, action, mean_action)
    assert out.shape == (B, output_size)
    assert jnp.allclose(out, ref, atol=2e-3, rtol=2e-3), \
        float(jnp.max(jnp.abs(out - ref)))

    # Multi-step grid with batch padding: B=600 -> TB=256, Bp=768, grid=(3,);
    # weights stay VMEM-resident across steps.
    B2 = 600
    ks2, ka2, km2 = jax.random.split(jax.random.PRNGKey(1), 3)
    state2 = jax.random.normal(ks2, (B2, state_dim), jnp.float32)
    action2 = jax.random.normal(ka2, (B2, action_len), jnp.float32)
    mean_action2 = jax.random.normal(km2, (B2, action_dim), jnp.float32)
    out2 = jax.block_until_ready(
        mean_critic_forward(params, state2, action2, mean_action2))
    ref2 = reference_forward(params, state2, action2, mean_action2)
    assert out2.shape == (B2, output_size)
    assert jnp.allclose(out2, ref2, atol=2e-3, rtol=2e-3), \
        float(jnp.max(jnp.abs(out2 - ref2)))

    print("KERNEL_OK")
</pallas_src>

<mosaic_0001>
module attributes {stable_mosaic.version = 11 : i64} {
  func.func @mean_critic_kernel(%arg0: i32, %arg1: memref<128x16xf32, #tpu.memory_space<vmem>>, %arg2: memref<128x10xf32, #tpu.memory_space<vmem>>, %arg3: memref<128x8xf32, #tpu.memory_space<vmem>>, %arg4: memref<16x128xbf16, #tpu.memory_space<vmem>>, %arg5: memref<10x128xbf16, #tpu.memory_space<vmem>>, %arg6: memref<8x128xbf16, #tpu.memory_space<vmem>>, %arg7: memref<1x128xf32, #tpu.memory_space<vmem>>, %arg8: memref<128x32xbf16, #tpu.memory_space<vmem>>, %arg9: memref<1x32xf32, #tpu.memory_space<vmem>>, %arg10: memref<1x32xbf16, #tpu.memory_space<vmem>>, %arg11: memref<1x1xf32, #tpu.memory_space<vmem>>, %arg12: memref<1x128xf32, #tpu.memory_space<vmem>>) attributes {dimension_semantics = [#tpu.dimension_semantics<parallel>], iteration_bounds = array<i64: 1>, scalar_prefetch = 0 : i64, scratch_operands = 0 : i64, tpu.core_type = #tpu.core_type<tc>, window_params = [{transform_indices = @transform_0, window_bounds = array<i64: 128, 16>}, {transform_indices = @transform_1, window_bounds = array<i64: 128, 10>}, {transform_indices = @transform_2, window_bounds = array<i64: 128, 8>}, {pipeline_mode = #tpu.pipeline_mode<synchronous>, transform_indices = @transform_3, window_bounds = array<i64: 16, 128>}, {pipeline_mode = #tpu.pipeline_mode<synchronous>, transform_indices = @transform_4, window_bounds = array<i64: 10, 128>}, {pipeline_mode = #tpu.pipeline_mode<synchronous>, transform_indices = @transform_5, window_bounds = array<i64: 8, 128>}, {pipeline_mode = #tpu.pipeline_mode<synchronous>, transform_indices = @transform_6, window_bounds = array<i64: 1, 128>}, {pipeline_mode = #tpu.pipeline_mode<synchronous>, transform_indices = @transform_7, window_bounds = array<i64: 128, 32>}, {pipeline_mode = #tpu.pipeline_mode<synchronous>, transform_indices = @transform_8, window_bounds = array<i64: 1, 32>}, {pipeline_mode = #tpu.pipeline_mode<synchronous>, transform_indices = @transform_9, window_bounds = array<i64: 1, 32>}, {pipeline_mode = #tpu.pipeline_mode<synchronous>, transform_indices = @transform_10, window_bounds = array<i64: 1, 1>}, {transform_indices = @transform_11, window_bounds = array<i64: 1, 128>}]} {
    %c0 = arith.constant 0 : index
    %c0_0 = arith.constant 0 : index
    %0 = vector.load %arg1[%c0, %c0_0] : memref<128x16xf32, #tpu.memory_space<vmem>>, vector<128x16xf32>
    %1 = arith.truncf %0 : vector<128x16xf32> to vector<128x16xbf16>
    %c0_1 = arith.constant 0 : index
    %c0_2 = arith.constant 0 : index
    %2 = vector.load %arg4[%c0_1, %c0_2] : memref<16x128xbf16, #tpu.memory_space<vmem>>, vector<16x128xbf16>
    %cst = arith.constant dense<0.000000e+00> : vector<128x128xf32>
    %3 = tpu.matmul %1, %2, %cst {dimension_numbers = #tpu.dot_dimension_numbers<[1], [0], [0], [1], [0, 0, 1, 1], [], []>} : vector<128x16xbf16>, vector<16x128xbf16>, vector<128x128xf32> -> vector<128x128xf32>
    %c0_3 = arith.constant 0 : index
    %c0_4 = arith.constant 0 : index
    %4 = vector.load %arg2[%c0_3, %c0_4] : memref<128x10xf32, #tpu.memory_space<vmem>>, vector<128x10xf32>
    %5 = arith.truncf %4 : vector<128x10xf32> to vector<128x10xbf16>
    %c0_5 = arith.constant 0 : index
    %c0_6 = arith.constant 0 : index
    %6 = vector.load %arg5[%c0_5, %c0_6] : memref<10x128xbf16, #tpu.memory_space<vmem>>, vector<10x128xbf16>
    %cst_7 = arith.constant dense<0.000000e+00> : vector<128x128xf32>
    %7 = tpu.matmul %5, %6, %cst_7 {dimension_numbers = #tpu.dot_dimension_numbers<[1], [0], [0], [1], [0, 0, 1, 1], [], []>} : vector<128x10xbf16>, vector<10x128xbf16>, vector<128x128xf32> -> vector<128x128xf32>
    %8 = arith.addf %3, %7 : vector<128x128xf32>
    %c0_8 = arith.constant 0 : index
    %c0_9 = arith.constant 0 : index
    %9 = vector.load %arg3[%c0_8, %c0_9] : memref<128x8xf32, #tpu.memory_space<vmem>>, vector<128x8xf32>
    %10 = arith.truncf %9 : vector<128x8xf32> to vector<128x8xbf16>
    %c0_10 = arith.constant 0 : index
    %c0_11 = arith.constant 0 : index
    %11 = vector.load %arg6[%c0_10, %c0_11] : memref<8x128xbf16, #tpu.memory_space<vmem>>, vector<8x128xbf16>
    %cst_12 = arith.constant dense<0.000000e+00> : vector<128x128xf32>
    %12 = tpu.matmul %10, %11, %cst_12 {dimension_numbers = #tpu.dot_dimension_numbers<[1], [0], [0], [1], [0, 0, 1, 1], [], []>} : vector<128x8xbf16>, vector<8x128xbf16>, vector<128x128xf32> -> vector<128x128xf32>
    %13 = arith.addf %8, %12 : vector<128x128xf32>
    %c0_13 = arith.constant 0 : index
    %c0_14 = arith.constant 0 : index
    %14 = vector.load %arg7[%c0_13, %c0_14] : memref<1x128xf32, #tpu.memory_space<vmem>>, vector<1x128xf32>
    %15 = vector.broadcast %14 : vector<1x128xf32> to vector<128x128xf32>
    %16 = arith.addf %13, %15 : vector<128x128xf32>
    %cst_15 = arith.constant 0.000000e+00 : f32
    %17 = vector.broadcast %cst_15 : f32 to vector<128x128xf32>
    %18 = arith.maximumf %16, %17 : vector<128x128xf32>
    %19 = arith.truncf %18 : vector<128x128xf32> to vector<128x128xbf16>
    %c0_16 = arith.constant 0 : index
    %c0_17 = arith.constant 0 : index
    %20 = vector.load %arg8[%c0_16, %c0_17] : memref<128x32xbf16, #tpu.memory_space<vmem>>, vector<128x32xbf16>
    %cst_18 = arith.constant dense<0.000000e+00> : vector<128x32xf32>
    %21 = tpu.matmul %19, %20, %cst_18 {dimension_numbers = #tpu.dot_dimension_numbers<[1], [0], [0], [1], [0, 0, 1, 1], [], []>} : vector<128x128xbf16>, vector<128x32xbf16>, vector<128x32xf32> -> vector<128x32xf32>
    %c0_19 = arith.constant 0 : index
    %c0_20 = arith.constant 0 : index
    %22 = vector.load %arg9[%c0_19, %c0_20] : memref<1x32xf32, #tpu.memory_space<vmem>>, vector<1x32xf32>
    %23 = vector.broadcast %22 : vector<1x32xf32> to vector<128x32xf32>
    %24 = arith.addf %21, %23 : vector<128x32xf32>
    %cst_21 = arith.constant 0.000000e+00 : f32
    %25 = vector.broadcast %cst_21 : f32 to vector<128x32xf32>
    %26 = arith.maximumf %24, %25 : vector<128x32xf32>
    %c0_22 = arith.constant 0 : index
    %c0_23 = arith.constant 0 : index
    %27 = vector.load %arg10[%c0_22, %c0_23] : memref<1x32xbf16, #tpu.memory_space<vmem>>, vector<1x32xbf16>
    %28 = arith.truncf %26 : vector<128x32xf32> to vector<128x32xbf16>
    %cst_24 = arith.constant dense<0.000000e+00> : vector<1x128xf32>
    %29 = tpu.matmul %27, %28, %cst_24 {dimension_numbers = #tpu.dot_dimension_numbers<[1], [1], [0], [0], [0, 0, 1, 0], [], []>} : vector<1x32xbf16>, vector<128x32xbf16>, vector<1x128xf32> -> vector<1x128xf32>
    %c0_25 = arith.constant 0 : index
    %c0_26 = arith.constant 0 : index
    %30 = vector.load %arg11[%c0_25, %c0_26] : memref<1x1xf32, #tpu.memory_space<vmem>>, vector<1x1xf32>
    %31 = vector.broadcast %30 : vector<1x1xf32> to vector<1x128xf32>
    %32 = arith.addf %29, %31 : vector<1x128xf32>
    %c0_27 = arith.constant 0 : index
    %c0_28 = arith.constant 0 : index
    %33 = vector.load %arg12[%c0_27, %c0_28] : memref<1x128xf32, #tpu.memory_space<vmem>>, vector<1x128xf32>
    tpu.vector_store %arg12[%c0_27, %c0_28], %32 {strides = array<i32>} : memref<1x128xf32, #tpu.memory_space<vmem>>, vector<1x128xf32>,
    return
  }
  func.func @transform_0(%arg0: i32) -> (i32, i32) {
    %c0_i32 = arith.constant 0 : i32
    %c0_i32_0 = arith.constant 0 : i32
    return %arg0, %c0_i32 : i32, i32
  }
  func.func @transform_1(%arg0: i32) -> (i32, i32) {
    %c0_i32 = arith.constant 0 : i32
    %c0_i32_0 = arith.constant 0 : i32
    return %arg0, %c0_i32 : i32, i32
  }
  func.func @transform_2(%arg0: i32) -> (i32, i32) {
    %c0_i32 = arith.constant 0 : i32
    %c0_i32_0 = arith.constant 0 : i32
    return %arg0, %c0_i32 : i32, i32
  }
  func.func @transform_3(%arg0: i32) -> (i32, i32) {
    %c0_i32 = arith.constant 0 : i32
    %c0_i32_0 = arith.constant 0 : i32
    %c0_i32_1 = arith.constant 0 : i32
    return %c0_i32, %c0_i32_0 : i32, i32
  }
  func.func @transform_4(%arg0: i32) -> (i32, i32) {
    %c0_i32 = arith.constant 0 : i32
    %c0_i32_0 = arith.constant 0 : i32
    %c0_i32_1 = arith.constant 0 : i32
    return %c0_i32, %c0_i32_0 : i32, i32
  }
  func.func @transform_5(%arg0: i32) -> (i32, i32) {
    %c0_i32 = arith.constant 0 : i32
    %c0_i32_0 = arith.constant 0 : i32
    %c0_i32_1 = arith.constant 0 : i32
    return %c0_i32, %c0_i32_0 : i32, i32
  }
  func.func @transform_6(%arg0: i32) -> (i32, i32) {
    %c0_i32 = arith.constant 0 : i32
    %c0_i32_0 = arith.constant 0 : i32
    %c0_i32_1 = arith.constant 0 : i32
    return %c0_i32, %c0_i32_0 : i32, i32
  }
  func.func @transform_7(%arg0: i32) -> (i32, i32) {
    %c0_i32 = arith.constant 0 : i32
    %c0_i32_0 = arith.constant 0 : i32
    %c0_i32_1 = arith.constant 0 : i32
    return %c0_i32, %c0_i32_0 : i32, i32
  }
  func.func @transform_8(%arg0: i32) -> (i32, i32) {
    %c0_i32 = arith.constant 0 : i32
    %c0_i32_0 = arith.constant 0 : i32
    %c0_i32_1 = arith.constant 0 : i32
    return %c0_i32, %c0_i32_0 : i32, i32
  }
  func.func @transform_9(%arg0: i32) -> (i32, i32) {
    %c0_i32 = arith.constant 0 : i32
    %c0_i32_0 = arith.constant 0 : i32
    %c0_i32_1 = arith.constant 0 : i32
    return %c0_i32, %c0_i32_0 : i32, i32
  }
  func.func @transform_10(%arg0: i32) -> (i32, i32) {
    %c0_i32 = arith.constant 0 : i32
    %c0_i32_0 = arith.constant 0 : i32
    %c0_i32_1 = arith.constant 0 : i32
    return %c0_i32, %c0_i32_0 : i32, i32
  }
  func.func @transform_11(%arg0: i32) -> (i32, i32) {
    %c0_i32 = arith.constant 0 : i32
    %c0_i32_0 = arith.constant 0 : i32
    return %c0_i32, %arg0 : i32, i32
  }
}

</mosaic_0001>

<llo_original>
// kernel: tpu_custom_call.1
$region0: #{tpu_custom_call.1}
  #allocation0 [shape = 'u32[]', space=smem, size = 0x4, offset = 0x4, fixed_abs, tag = 'smem constant byte address 0x4 - core index']
  #allocation1 [shape = 'u32[72,128]{1,0:T(1,128)}', space=vmem, size = 0x9000, scoped, tag = 'internal scratch']
  #allocation2 [shape = 'f32[1,1]{1,0:T(1,128)S(1)}', space=vmem, size = 0x200, scoped, tag = 'scoped memory for tpu_custom_call.1']
  %s0 = inlined_call_operand.vmem [shape: f32[128,16], index: 0, kind: input, shape index: {}]
  %s1 = inlined_call_operand.vmem [shape: f32[128,10], index: 1, kind: input, shape index: {}]
  %s2 = inlined_call_operand.vmem [shape: f32[128,8], index: 2, kind: input, shape index: {}]
  %s3 = inlined_call_operand.vmem [shape: bf16[16,128], index: 3, kind: input, shape index: {}]
  %s4 = inlined_call_operand.vmem [shape: bf16[10,128], index: 4, kind: input, shape index: {}]
  %s5 = inlined_call_operand.vmem [shape: bf16[8,128], index: 5, kind: input, shape index: {}]
  %s6 = inlined_call_operand.vmem [shape: f32[1,128], index: 6, kind: input, shape index: {}]
  %s7 = inlined_call_operand.vmem [shape: bf16[128,32], index: 7, kind: input, shape index: {}]
  %s8 = inlined_call_operand.vmem [shape: f32[1,32], index: 8, kind: input, shape index: {}]
  %s9 = inlined_call_operand.vmem [shape: bf16[1,32], index: 9, kind: input, shape index: {}]
  %s10 = inlined_call_operand.<no memory space> [shape: f32[1,1], index: 10, kind: input, shape index: {}]
  %s11 = inlined_call_operand.hbm [shape: f32[1,128], index: 11, kind: output, shape index: {}]
  %s12 = sld [smem:[#allocation0]]
  $region54: #{tpu_custom_call.1} parent=0
    _
  %s14 = ssub.s32 1, %s12
  %s15 = scalar_select 0, %s14, %s12
  %v16 = vstv %s10
  %17 = vst [vmem:[#allocation2] sm:$0x1] %v16
  $region1: #{tpu_custom_call.1} parent=0
    #allocation3 [shape = 'u8[512]{0}', space=vmem, size = 0x400, scoped, tag = 'output window, operand 0, single buffered']
    #allocation4 [shape = 's32[1]{0}', space=sflag, size = 0x4, scoped, tag = 'scoped memory for tpu_custom_call.1']
    %18 = vsyncpa [#allocation4], 0
    // Predicated region
    $region2: #{tpu_custom_call.1} parent=1 // pred_check
      _
    $region3: #{tpu_custom_call.1} parent=1 // pred_check_branch
      %20 = sbr.rel (0) target = $region5
    $region4: #{tpu_custom_call.1} parent=1 // pred_region
      _
    $region5: #{tpu_custom_call.1} parent=1 // pred_fallthru
      _
    // Predicated region
    $region6: #{tpu_custom_call.1} parent=1 // pred_check
      _
    $region7: #{tpu_custom_call.1} parent=1 // pred_check_branch
      %22 = sbr.rel (0) target = $region9
    $region8: #{tpu_custom_call.1} parent=1 // pred_region
      _
    $region9: #{tpu_custom_call.1} parent=1 // pred_fallthru
      _
    // Predicated region
    $region10: #{tpu_custom_call.1} parent=1 // pred_check
      _
    $region11: #{tpu_custom_call.1} parent=1 // pred_check_branch
      %24 = sbr.rel (0) target = $region13
    $region12: #{tpu_custom_call.1} parent=1 // pred_region
      _
    $region13: #{tpu_custom_call.1} parent=1 // pred_fallthru
      _
    // Predicated region
    $region14: #{tpu_custom_call.1} parent=1 // pred_check
      _
    $region15: #{tpu_custom_call.1} parent=1 // pred_check_branch
      %26 = sbr.rel (0) target = $region17
    $region16: #{tpu_custom_call.1} parent=1 // pred_region
      _
    $region17: #{tpu_custom_call.1} parent=1 // pred_fallthru
      _
    // Predicated region
    $region18: #{tpu_custom_call.1} parent=1 // pred_check
      _
    $region19: #{tpu_custom_call.1} parent=1 // pred_check_branch
      %28 = sbr.rel (0) target = $region21
    $region20: #{tpu_custom_call.1} parent=1 // pred_region
      _
    $region21: #{tpu_custom_call.1} parent=1 // pred_fallthru
      _
    // Predicated region
    $region22: #{tpu_custom_call.1} parent=1 // pred_check
      _
    $region23: #{tpu_custom_call.1} parent=1 // pred_check_branch
      %30 = sbr.rel (0) target = $region25
    $region24: #{tpu_custom_call.1} parent=1 // pred_region
      _
    $region25: #{tpu_custom_call.1} parent=1 // pred_fallthru
      _
    // Predicated region
    $region26: #{tpu_custom_call.1} parent=1 // pred_check
      _
    $region27: #{tpu_custom_call.1} parent=1 // pred_check_branch
      %32 = sbr.rel (0) target = $region29
    $region28: #{tpu_custom_call.1} parent=1 // pred_region
      _
    $region29: #{tpu_custom_call.1} parent=1 // pred_fallthru
      _
    // Predicated region
    $region30: #{tpu_custom_call.1} parent=1 // pred_check
      _
    $region31: #{tpu_custom_call.1} parent=1 // pred_check_branch
      %34 = sbr.rel (0) target = $region33
    $region32: #{tpu_custom_call.1} parent=1 // pred_region
      _
    $region33: #{tpu_custom_call.1} parent=1 // pred_fallthru
      _
    // Predicated region
    $region34: #{tpu_custom_call.1} parent=1 // pred_check
      _
    $region35: #{tpu_custom_call.1} parent=1 // pred_check_branch
      %36 = sbr.rel (0) target = $region37
    $region36: #{tpu_custom_call.1} parent=1 // pred_region
      _
    $region37: #{tpu_custom_call.1} parent=1 // pred_fallthru
      _
    // Predicated region
    $region38: #{tpu_custom_call.1} parent=1 // pred_check
      _
    $region39: #{tpu_custom_call.1} parent=1 // pred_check_branch
      %38 = sbr.rel (0) target = $region41
    $region40: #{tpu_custom_call.1} parent=1 // pred_region
      _
    $region41: #{tpu_custom_call.1} parent=1 // pred_fallthru
      _
    // Predicated region
    $region42: #{tpu_custom_call.1} parent=1 // pred_check
      _
    $region43: #{tpu_custom_call.1} parent=1 // pred_check_branch
      %40 = sbr.rel (0) target = $region45
    $region44: #{tpu_custom_call.1} parent=1 // pred_region
      _
    $region45: #{tpu_custom_call.1} parent=1 // pred_fallthru
      _
    %v42 = vld [vmem:[%s0] sm:$0xff]
    %v43 = vld [vmem:[%s0 + $0x8] sm:$0xff]
    %v44 = vld [vmem:[%s0 + $0x10] sm:$0xff]
    %v45 = vld [vmem:[%s0 + $0x18] sm:$0xff]
    %v46 = vld [vmem:[%s0 + $0x20] sm:$0xff]
    %v47 = vld [vmem:[%s0 + $0x28] sm:$0xff]
    %v48 = vld [vmem:[%s0 + $0x30] sm:$0xff]
    %v49 = vld [vmem:[%s0 + $0x38] sm:$0xff]
    %v50 = vld [vmem:[%s0 + $0x40] sm:$0xff]
    %v51 = vld [vmem:[%s0 + $0x48] sm:$0xff]
    %v52 = vld [vmem:[%s0 + $0x50] sm:$0xff]
    %v53 = vld [vmem:[%s0 + $0x58] sm:$0xff]
    %v54 = vld [vmem:[%s0 + $0x60] sm:$0xff]
    %v55 = vld [vmem:[%s0 + $0x68] sm:$0xff]
    %v56 = vld [vmem:[%s0 + $0x70] sm:$0xff]
    %v57 = vld [vmem:[%s0 + $0x78] sm:$0xff]
    %v58 = vpack.c.bf16 %v43, %v42
    %v59 = vpack.c.bf16 %v45, %v44
    %v60 = vpack.c.bf16 %v47, %v46
    %v61 = vpack.c.bf16 %v49, %v48
    %v62 = vpack.c.bf16 %v51, %v50
    %v63 = vpack.c.bf16 %v53, %v52
    %v64 = vpack.c.bf16 %v55, %v54
    %v65 = vpack.c.bf16 %v57, %v56
    %v66 = vld [vmem:[%s3] sm:$0xf]
    %v67 = vld [vmem:[%s3 + $0x4] sm:$0xf]
    %v68 = vld [vmem:[%s1] sm:$0xff]
    %v69 = vld [vmem:[%s1 + $0x8] sm:$0xff]
    %v70 = vld [vmem:[%s1 + $0x10] sm:$0xff]
    %v71 = vld [vmem:[%s1 + $0x18] sm:$0xff]
    %v72 = vld [vmem:[%s1 + $0x20] sm:$0xff]
    %v73 = vld [vmem:[%s1 + $0x28] sm:$0xff]
    %v74 = vld [vmem:[%s1 + $0x30] sm:$0xff]
    %v75 = vld [vmem:[%s1 + $0x38] sm:$0xff]
    %v76 = vld [vmem:[%s1 + $0x40] sm:$0xff]
    %v77 = vld [vmem:[%s1 + $0x48] sm:$0xff]
    %v78 = vld [vmem:[%s1 + $0x50] sm:$0xff]
    %v79 = vld [vmem:[%s1 + $0x58] sm:$0xff]
    %v80 = vld [vmem:[%s1 + $0x60] sm:$0xff]
    %v81 = vld [vmem:[%s1 + $0x68] sm:$0xff]
    %v82 = vld [vmem:[%s1 + $0x70] sm:$0xff]
    %v83 = vld [vmem:[%s1 + $0x78] sm:$0xff]
    %v84 = vpack.c.bf16 %v69, %v68
    %v85 = vpack.c.bf16 %v71, %v70
    %v86 = vpack.c.bf16 %v73, %v72
    %v87 = vpack.c.bf16 %v75, %v74
    %v88 = vpack.c.bf16 %v77, %v76
    %v89 = vpack.c.bf16 %v79, %v78
    %v90 = vpack.c.bf16 %v81, %v80
    %v91 = vpack.c.bf16 %v83, %v82
    %v92 = vld [vmem:[%s4] sm:$0xf]
    %v93 = vld [vmem:[%s4 + $0x4] sm:$0x1]
    %v96 = vunpack.c.l.b16 %v92
    %v97 = vunpack.c.l.b16 %v93
    %v98 = vpack.c.b16 %v97, %v96
    %vm99 = vcmask 80896
    %v101 = vsel %vm99, %v84, 0
    %v104 = vsel %vm99, %v85, 0
    %v107 = vsel %vm99, %v86, 0
    %v110 = vsel %vm99, %v87, 0
    %v113 = vsel %vm99, %v88, 0
    %v116 = vsel %vm99, %v89, 0
    %v119 = vsel %vm99, %v90, 0
    %v122 = vsel %vm99, %v91, 0
    %vm124 = vcmask 1044480
    %v126 = vsel %vm124, %v98, 0
    %128 = vmatpush.bf16.msra.mxu0 0
    %129 = vmatpush.bf16.msra.mxu0 0
    %130 = vmatpush.bf16.msra.mxu0 0
    %131 = vmatpush.bf16.msra.mxu0 0
    %132 = vmatpush.bf16.msra.mxu0 0
    %133 = vmatpush.bf16.msra.mxu0 0
    %134 = vmatpush.bf16.msra.mxu0 0
    %135 = vmatpush.bf16.msra.mxu0 %v126
    %136 = vmatmul.bf16.gmra.mxu0 %v101
    %v137 = vpop.f32.mrf.mxu0
    %v138 = vadd.f32 0.0, %v137
    %v139 = vpop.f32.mrf.mxu0
    %v140 = vadd.f32 0.0, %v139
    %141 = vmatmul.bf16.gmra.mxu0 %v104
    %v142 = vpop.f32.mrf.mxu0
    %v143 = vadd.f32 0.0, %v142
    %v144 = vpop.f32.mrf.mxu0
    %v145 = vadd.f32 0.0, %v144
    %146 = vmatmul.bf16.gmra.mxu0 %v107
    %v147 = vpop.f32.mrf.mxu0
    %v148 = vadd.f32 0.0, %v147
    %v149 = vpop.f32.mrf.mxu0
    %v150 = vadd.f32 0.0, %v149
    %151 = vmatmul.bf16.gmra.mxu0 %v110
    %v152 = vpop.f32.mrf.mxu0
    %v153 = vadd.f32 0.0, %v152
    %v154 = vpop.f32.mrf.mxu0
    %v155 = vadd.f32 0.0, %v154
    %156 = vmatmul.bf16.gmra.mxu0 %v113
    %v157 = vpop.f32.mrf.mxu0
    %v158 = vadd.f32 0.0, %v157
    %v159 = vpop.f32.mrf.mxu0
    %v160 = vadd.f32 0.0, %v159
    %161 = vmatmul.bf16.gmra.mxu0 %v116
    %v162 = vpop.f32.mrf.mxu0
    %v163 = vadd.f32 0.0, %v162
    %v164 = vpop.f32.mrf.mxu0
    %v165 = vadd.f32 0.0, %v164
    %166 = vmatmul.bf16.gmra.mxu0 %v119
    %v167 = vpop.f32.mrf.mxu0
    %v168 = vadd.f32 0.0, %v167
    %v169 = vpop.f32.mrf.mxu0
    %v170 = vadd.f32 0.0, %v169
    %171 = vmatmul.bf16.gmra.mxu0 %v122
    %v172 = vpop.f32.mrf.mxu0
    %v173 = vadd.f32 0.0, %v172
    %v174 = vpop.f32.mrf.mxu0
    %v175 = vadd.f32 0.0, %v174
    %176 = vdwg.mxu0
    %v179 = vunpack.c.l.b16 %v66
    %v180 = vunpack.c.l.b16 %v67
    %v181 = vpack.c.b16 %v180, %v179
    %vm183 = vcmask 130048
    %v185 = vsel %vm183, %v58, 0
    %v188 = vsel %vm183, %v59, 0
    %v191 = vsel %vm183, %v60, 0
    %v194 = vsel %vm183, %v61, 0
    %v197 = vsel %vm183, %v62, 0
    %v200 = vsel %vm183, %v63, 0
    %v203 = vsel %vm183, %v64, 0
    %v206 = vsel %vm183, %v65, 0
    %208 = vmatpush.bf16.msra.mxu0 0
    %209 = vmatpush.bf16.msra.mxu0 0
    %210 = vmatpush.bf16.msra.mxu0 0
    %211 = vmatpush.bf16.msra.mxu0 0
    %212 = vmatpush.bf16.msra.mxu0 0
    %213 = vmatpush.bf16.msra.mxu0 0
    %214 = vmatpush.bf16.msra.mxu0 0
    %215 = vmatpush.bf16.msra.mxu0 %v181
    %216 = vmatmul.bf16.gmra.mxu0 %v185
    %v217 = vpop.f32.mrf.mxu0
    %v218 = vadd.f32 %v138, %v217
    %v219 = vpop.f32.mrf.mxu0
    %v220 = vadd.f32 %v140, %v219
    %221 = vmatmul.bf16.gmra.mxu0 %v188
    %v222 = vpop.f32.mrf.mxu0
    %v223 = vadd.f32 %v143, %v222
    %v224 = vpop.f32.mrf.mxu0
    %v225 = vadd.f32 %v145, %v224
    %226 = vmatmul.bf16.gmra.mxu0 %v191
    %v227 = vpop.f32.mrf.mxu0
    %v228 = vadd.f32 %v148, %v227
    %v229 = vpop.f32.mrf.mxu0
    %v230 = vadd.f32 %v150, %v229
    %231 = vmatmul.bf16.gmra.mxu0 %v194
    %v232 = vpop.f32.mrf.mxu0
    %v233 = vadd.f32 %v153, %v232
    %v234 = vpop.f32.mrf.mxu0
    %v235 = vadd.f32 %v155, %v234
    %236 = vmatmul.bf16.gmra.mxu0 %v197
    %v237 = vpop.f32.mrf.mxu0
    %v238 = vadd.f32 %v158, %v237
    %v239 = vpop.f32.mrf.mxu0
    %v240 = vadd.f32 %v160, %v239
    %241 = vmatmul.bf16.gmra.mxu0 %v200
    %v242 = vpop.f32.mrf.mxu0
    %v243 = vadd.f32 %v163, %v242
    %v244 = vpop.f32.mrf.mxu0
    %v245 = vadd.f32 %v165, %v244
    %246 = vmatmul.bf16.gmra.mxu0 %v203
    %v247 = vpop.f32.mrf.mxu0
    %v248 = vadd.f32 %v168, %v247
    %v249 = vpop.f32.mrf.mxu0
    %v250 = vadd.f32 %v170, %v249
    %251 = vmatmul.bf16.gmra.mxu0 %v206
    %v252 = vpop.f32.mrf.mxu0
    %v253 = vadd.f32 %v173, %v252
    %v254 = vpop.f32.mrf.mxu0
    %v255 = vadd.f32 %v175, %v254
    %256 = vdwg.mxu0
    %v257 = vld [vmem:[%s2] sm:$0xff]
    %v258 = vld [vmem:[%s2 + $0x8] sm:$0xff]
    %v259 = vld [vmem:[%s2 + $0x10] sm:$0xff]
    %v260 = vld [vmem:[%s2 + $0x18] sm:$0xff]
    %v261 = vld [vmem:[%s2 + $0x20] sm:$0xff]
    %v262 = vld [vmem:[%s2 + $0x28] sm:$0xff]
    %v263 = vld [vmem:[%s2 + $0x30] sm:$0xff]
    %v264 = vld [vmem:[%s2 + $0x38] sm:$0xff]
    %v265 = vld [vmem:[%s2 + $0x40] sm:$0xff]
    %v266 = vld [vmem:[%s2 + $0x48] sm:$0xff]
    %v267 = vld [vmem:[%s2 + $0x50] sm:$0xff]
    %v268 = vld [vmem:[%s2 + $0x58] sm:$0xff]
    %v269 = vld [vmem:[%s2 + $0x60] sm:$0xff]
    %v270 = vld [vmem:[%s2 + $0x68] sm:$0xff]
    %v271 = vld [vmem:[%s2 + $0x70] sm:$0xff]
    %v272 = vld [vmem:[%s2 + $0x78] sm:$0xff]
    %v273 = vpack.c.bf16 %v258, %v257
    %v274 = vpack.c.bf16 %v260, %v259
    %v275 = vpack.c.bf16 %v262, %v261
    %v276 = vpack.c.bf16 %v264, %v263
    %v277 = vpack.c.bf16 %v266, %v265
    %v278 = vpack.c.bf16 %v268, %v267
    %v279 = vpack.c.bf16 %v270, %v269
    %v280 = vpack.c.bf16 %v272, %v271
    %v281 = vld [vmem:[%s5] sm:$0xf]
    %vm282 = vcmask 64512
    %v284 = vsel %vm282, %v273, 0
    %v287 = vsel %vm282, %v274, 0
    %v290 = vsel %vm282, %v275, 0
    %v293 = vsel %vm282, %v276, 0
    %v296 = vsel %vm282, %v277, 0
    %v299 = vsel %vm282, %v278, 0
    %v302 = vsel %vm282, %v279, 0
    %v305 = vsel %vm282, %v280, 0
    %vm307 = vcmask 1043456
    %v309 = vsel %vm307, %v281, 0
    %311 = vmatpush.bf16.msra.mxu0 0
    %312 = vmatpush.bf16.msra.mxu0 0
    %313 = vmatpush.bf16.msra.mxu0 0
    %314 = vmatpush.bf16.msra.mxu0 0
    %315 = vmatpush.bf16.msra.mxu0 0
    %316 = vmatpush.bf16.msra.mxu0 0
    %317 = vmatpush.bf16.msra.mxu0 0
    %318 = vmatpush.bf16.msra.mxu0 %v309
    %319 = vmatmul.bf16.gmra.mxu0 %v284
    %v320 = vpop.f32.mrf.mxu0
    %v321 = vadd.f32 0.0, %v320
    %v322 = vpop.f32.mrf.mxu0
    %v323 = vadd.f32 0.0, %v322
    %324 = vmatmul.bf16.gmra.mxu0 %v287
    %v325 = vpop.f32.mrf.mxu0
    %v326 = vadd.f32 0.0, %v325
    %v327 = vpop.f32.mrf.mxu0
    %v328 = vadd.f32 0.0, %v327
    %329 = vmatmul.bf16.gmra.mxu0 %v290
    %v330 = vpop.f32.mrf.mxu0
    %v331 = vadd.f32 0.0, %v330
    %v332 = vpop.f32.mrf.mxu0
    %v333 = vadd.f32 0.0, %v332
    %334 = vmatmul.bf16.gmra.mxu0 %v293
    %v335 = vpop.f32.mrf.mxu0
    %v336 = vadd.f32 0.0, %v335
    %v337 = vpop.f32.mrf.mxu0
    %v338 = vadd.f32 0.0, %v337
    %339 = vmatmul.bf16.gmra.mxu0 %v296
    %v340 = vpop.f32.mrf.mxu0
    %v341 = vadd.f32 0.0, %v340
    %v342 = vpop.f32.mrf.mxu0
    %v343 = vadd.f32 0.0, %v342
    %344 = vmatmul.bf16.gmra.mxu0 %v299
    %v345 = vpop.f32.mrf.mxu0
    %v346 = vadd.f32 0.0, %v345
    %v347 = vpop.f32.mrf.mxu0
    %v348 = vadd.f32 0.0, %v347
    %349 = vmatmul.bf16.gmra.mxu0 %v302
    %v350 = vpop.f32.mrf.mxu0
    %v351 = vadd.f32 0.0, %v350
    %v352 = vpop.f32.mrf.mxu0
    %v353 = vadd.f32 0.0, %v352
    %354 = vmatmul.bf16.gmra.mxu0 %v305
    %v355 = vpop.f32.mrf.mxu0
    %v356 = vadd.f32 0.0, %v355
    %v357 = vpop.f32.mrf.mxu0
    %v358 = vadd.f32 0.0, %v357
    %359 = vdwg.mxu0
    %v360 = vadd.f32 %v218, %v321
    %v361 = vadd.f32 %v220, %v323
    %v362 = vadd.f32 %v223, %v326
    %v363 = vadd.f32 %v225, %v328
    %v364 = vadd.f32 %v228, %v331
    %v365 = vadd.f32 %v230, %v333
    %v366 = vadd.f32 %v233, %v336
    %v367 = vadd.f32 %v235, %v338
    %v368 = vadd.f32 %v238, %v341
    %v369 = vadd.f32 %v240, %v343
    %v370 = vadd.f32 %v243, %v346
    %v371 = vadd.f32 %v245, %v348
    %v372 = vadd.f32 %v248, %v351
    %v373 = vadd.f32 %v250, %v353
    %v374 = vadd.f32 %v253, %v356
    %v375 = vadd.f32 %v255, %v358
    %v376 = vld [vmem:[%s6] sm:$0x1]
    %v378 = vperm.slane %v376, 0
    %v380 = vadd.f32 %v360, %v378
    %v381 = vadd.f32 %v361, %v378
    %v382 = vadd.f32 %v362, %v378
    %v383 = vadd.f32 %v363, %v378
    %v384 = vadd.f32 %v364, %v378
    %v385 = vadd.f32 %v365, %v378
    %v386 = vadd.f32 %v366, %v378
    %v387 = vadd.f32 %v367, %v378
    %v388 = vadd.f32 %v368, %v378
    %v389 = vadd.f32 %v369, %v378
    %v390 = vadd.f32 %v370, %v378
    %v391 = vadd.f32 %v371, %v378
    %v392 = vadd.f32 %v372, %v378
    %v393 = vadd.f32 %v373, %v378
    %v394 = vadd.f32 %v374, %v378
    %v395 = vadd.f32 %v375, %v378
    %v396 = vmax.f32 %v380, 0.0
    %v397 = vmax.f32 %v381, 0.0
    %v398 = vmax.f32 %v382, 0.0
    %v399 = vmax.f32 %v383, 0.0
    %v400 = vmax.f32 %v384, 0.0
    %v401 = vmax.f32 %v385, 0.0
    %v402 = vmax.f32 %v386, 0.0
    %v403 = vmax.f32 %v387, 0.0
    %v404 = vmax.f32 %v388, 0.0
    %v405 = vmax.f32 %v389, 0.0
    %v406 = vmax.f32 %v390, 0.0
    %v407 = vmax.f32 %v391, 0.0
    %v408 = vmax.f32 %v392, 0.0
    %v409 = vmax.f32 %v393, 0.0
    %v410 = vmax.f32 %v394, 0.0
    %v411 = vmax.f32 %v395, 0.0
    %v412 = vpack.c.bf16 %v397, %v396
    %v413 = vpack.c.bf16 %v399, %v398
    %v414 = vpack.c.bf16 %v401, %v400
    %v415 = vpack.c.bf16 %v403, %v402
    %v416 = vpack.c.bf16 %v405, %v404
    %v417 = vpack.c.bf16 %v407, %v406
    %v418 = vpack.c.bf16 %v409, %v408
    %v419 = vpack.c.bf16 %v411, %v410
    %v420 = vld [vmem:[%s7] sm:$0xf]
    %v421 = vld [vmem:[%s7 + $0x4] sm:$0xf]
    %v422 = vld [vmem:[%s7 + $0x8] sm:$0xf]
    %v423 = vld [vmem:[%s7 + $0xc] sm:$0xf]
    %v424 = vld [vmem:[%s7 + $0x10] sm:$0xf]
    %v425 = vld [vmem:[%s7 + $0x14] sm:$0xf]
    %v426 = vld [vmem:[%s7 + $0x18] sm:$0xf]
    %v427 = vld [vmem:[%s7 + $0x1c] sm:$0xf]
    %v428 = vld [vmem:[%s7 + $0x20] sm:$0xf]
    %v429 = vld [vmem:[%s7 + $0x24] sm:$0xf]
    %v430 = vld [vmem:[%s7 + $0x28] sm:$0xf]
    %v431 = vld [vmem:[%s7 + $0x2c] sm:$0xf]
    %v432 = vld [vmem:[%s7 + $0x30] sm:$0xf]
    %v433 = vld [vmem:[%s7 + $0x34] sm:$0xf]
    %v434 = vld [vmem:[%s7 + $0x38] sm:$0xf]
    %v435 = vld [vmem:[%s7 + $0x3c] sm:$0xf]
    %v436 = vld [vmem:[%s8] sm:$0x1]
    %v438 = vperm.slane %v436, 0
    %v456 = vunpack.c.l.b16 %v420
    %v457 = vunpack.c.l.b16 %v421
    %v458 = vunpack.c.l.b16 %v422
    %v459 = vunpack.c.l.b16 %v423
    %v460 = vunpack.c.l.b16 %v424
    %v461 = vunpack.c.l.b16 %v425
    %v462 = vunpack.c.l.b16 %v426
    %v463 = vunpack.c.l.b16 %v427
    %v464 = vunpack.c.l.b16 %v428
    %v465 = vunpack.c.l.b16 %v429
    %v466 = vunpack.c.l.b16 %v430
    %v467 = vunpack.c.l.b16 %v431
    %v468 = vunpack.c.l.b16 %v432
    %v469 = vunpack.c.l.b16 %v433
    %v470 = vunpack.c.l.b16 %v434
    %v471 = vunpack.c.l.b16 %v435
    %v472 = vpack.c.b16 %v457, %v456
    %v473 = vpack.c.b16 %v459, %v458
    %v474 = vpack.c.b16 %v461, %v460
    %v475 = vpack.c.b16 %v463, %v462
    %v476 = vpack.c.b16 %v465, %v464
    %v477 = vpack.c.b16 %v467, %v466
    %v478 = vpack.c.b16 %v469, %v468
    %v479 = vpack.c.b16 %v471, %v470
    %488 = vmatpush.bf16.msra.mxu0 %v479
    %489 = vmatpush.bf16.msra.mxu0 %v478
    %490 = vmatpush.bf16.msra.mxu0 %v477
    %491 = vmatpush.bf16.msra.mxu0 %v476
    %492 = vmatpush.bf16.msra.mxu0 %v475
    %493 = vmatpush.bf16.msra.mxu0 %v474
    %494 = vmatpush.bf16.msra.mxu0 %v473
    %495 = vmatpush.bf16.msra.mxu0 %v472
    %496 = vmatmul.bf16.gmra.mxu0 %v412
    %v497 = vpop.f32.mrf.mxu0
    %v498 = vadd.f32 %v438, %v497
    %v499 = vpop.f32.mrf.mxu0
    %v500 = vadd.f32 %v438, %v499
    %501 = vmatmul.bf16.gmra.mxu0 %v413
    %v502 = vpop.f32.mrf.mxu0
    %v503 = vadd.f32 %v438, %v502
    %v504 = vpop.f32.mrf.mxu0
    %v505 = vadd.f32 %v438, %v504
    %506 = vmatmul.bf16.gmra.mxu0 %v414
    %v507 = vpop.f32.mrf.mxu0
    %v508 = vadd.f32 %v438, %v507
    %v509 = vpop.f32.mrf.mxu0
    %v510 = vadd.f32 %v438, %v509
    %511 = vmatmul.bf16.gmra.mxu0 %v415
    %v512 = vpop.f32.mrf.mxu0
    %v513 = vadd.f32 %v438, %v512
    %v514 = vpop.f32.mrf.mxu0
    %v515 = vadd.f32 %v438, %v514
    %516 = vmatmul.bf16.gmra.mxu0 %v416
    %v517 = vpop.f32.mrf.mxu0
    %v518 = vadd.f32 %v438, %v517
    %v519 = vpop.f32.mrf.mxu0
    %v520 = vadd.f32 %v438, %v519
    %521 = vmatmul.bf16.gmra.mxu0 %v417
    %v522 = vpop.f32.mrf.mxu0
    %v523 = vadd.f32 %v438, %v522
    %v524 = vpop.f32.mrf.mxu0
    %v525 = vadd.f32 %v438, %v524
    %526 = vmatmul.bf16.gmra.mxu0 %v418
    %v527 = vpop.f32.mrf.mxu0
    %v528 = vadd.f32 %v438, %v527
    %v529 = vpop.f32.mrf.mxu0
    %v530 = vadd.f32 %v438, %v529
    %531 = vmatmul.bf16.gmra.mxu0 %v419
    %v532 = vpop.f32.mrf.mxu0
    %v533 = vadd.f32 %v438, %v532
    %v534 = vpop.f32.mrf.mxu0
    %v535 = vadd.f32 %v438, %v534
    %536 = vdwg.mxu0
    %v537 = vmax.f32 %v498, 0.0
    %v538 = vmax.f32 %v500, 0.0
    %v539 = vmax.f32 %v503, 0.0
    %v540 = vmax.f32 %v505, 0.0
    %v541 = vmax.f32 %v508, 0.0
    %v542 = vmax.f32 %v510, 0.0
    %v543 = vmax.f32 %v513, 0.0
    %v544 = vmax.f32 %v515, 0.0
    %v545 = vmax.f32 %v518, 0.0
    %v546 = vmax.f32 %v520, 0.0
    %v547 = vmax.f32 %v523, 0.0
    %v548 = vmax.f32 %v525, 0.0
    %v549 = vmax.f32 %v528, 0.0
    %v550 = vmax.f32 %v530, 0.0
    %v551 = vmax.f32 %v533, 0.0
    %v552 = vmax.f32 %v535, 0.0
    %v553 = vld [vmem:[%s9] sm:$0x1]
    %v554 = vpack.c.bf16 %v538, %v537
    %v555 = vpack.c.bf16 %v540, %v539
    %v556 = vpack.c.bf16 %v542, %v541
    %v557 = vpack.c.bf16 %v544, %v543
    %v558 = vpack.c.bf16 %v546, %v545
    %v559 = vpack.c.bf16 %v548, %v547
    %v560 = vpack.c.bf16 %v550, %v549
    %v561 = vpack.c.bf16 %v552, %v551
    %v562 = vld [vmem:[#allocation2] sm:$0x1]
    %564 = vset.pattern.permute.xlu0 0
    %565 = vperm.xlu0 %564, %v562
    %v566 = vpop.permute.xlu0 %565
    %v568 = vperm.slane %v566, 0
    %vm569 = vcmask 261120
    %v571 = vsel %vm569, %v553, 0
    %v574 = vsel %vm569, %v554, 0
    %v577 = vsel %vm569, %v555, 0
    %v580 = vsel %vm569, %v556, 0
    %v583 = vsel %vm569, %v557, 0
    %v586 = vsel %vm569, %v558, 0
    %v589 = vsel %vm569, %v559, 0
    %v592 = vsel %vm569, %v560, 0
    %v595 = vsel %vm569, %v561, 0
    %597 = vmatpush.bf16.xpose.msra.mxu0 %v595
    %598 = vmatpush.bf16.xpose.msra.mxu0 %v592
    %599 = vmatpush.bf16.xpose.msra.mxu0 %v589
    %600 = vmatpush.bf16.xpose.msra.mxu0 %v586
    %601 = vmatpush.bf16.xpose.msra.mxu0 %v583
    %602 = vmatpush.bf16.xpose.msra.mxu0 %v580
    %603 = vmatpush.bf16.xpose.msra.mxu0 %v577
    %604 = vmatpush.bf16.xpose.msra.mxu0 %v574
    %605 = vmatmul.bf16.gmra.mxu0 %v571
    %v606 = vpop.f32.mrf.mxu0
    %v607 = vadd.f32 %v568, %v606
    %v608 = vpop.f32.mrf.mxu0
    %609 = vdwg.mxu0
    %610 = vst [vmem:[#allocation3] sm:$0x1] %v607
    // Predicated region
    $region46: #{tpu_custom_call.1} parent=1 // pred_check
      _
    $region47: #{tpu_custom_call.1} parent=1 // pred_check_branch
      %612 = sbr.rel (0) target = $region49
    $region48: #{tpu_custom_call.1} parent=1 // pred_region
      %614 = vsyncadd [#allocation4], 0
      %s616 = sshll.u32 [#allocation3], 4
      %s617 = int_to_ptr.vmem [resolvable:$true] %s616
      %s618 = sshll.u32 %s11, 4
      %s619 = int_to_ptr.hbm [resolvable:$true] %s618
      %621 = dma.vmem_to_hbm [thread:$0]  %s617, 16, %s619, [#allocation4]
    $region49: #{tpu_custom_call.1} parent=1 // pred_fallthru
      _
    // Predicated region
    $region50: #{tpu_custom_call.1} parent=1 // pred_check
      _
    $region51: #{tpu_custom_call.1} parent=1 // pred_check_branch
      %623 = sbr.rel (0) target = $region53
    $region52: #{tpu_custom_call.1} parent=1 // pred_region
      %625 = dma.done [#allocation4], 16
    $region53: #{tpu_custom_call.1} parent=1 // pred_fallthru
      _
    %626 = vsyncpa [#allocation4], 1

</llo_original>
